<compile_context>
chip_gen: v5e
topology: v5e:2x2
jax: 0.10.0
libtpu: 0.0.40
codegen_flags: <defaults>
</compile_context>

<pallas_src>
import functools

import jax
import jax.numpy as jnp
from jax.experimental import pallas as pl
from jax.experimental.pallas import tpu as pltpu


def _lista_kernel(thr_ref, y_ref, wt_ref, st_ref, out_ref, *, num_iter):
    """Single invocation: runs all LISTA iterations unrolled in-kernel.

    thr_ref : SMEM (numIter,) f32     per-iteration soft thresholds
    y_ref   : VMEM (B, m)     f32     measurements
    wt_ref  : VMEM (m, n)     f32     == W.weight.T
    st_ref  : VMEM (n, n)     f32/bf16== S.weight.T
    out_ref : VMEM (numIter, B, n) f32 stacked iterates d_1 .. d_numIter
    """
    st_dtype = st_ref.dtype

    # Cached W @ y term (f32 operands, f32 MXU accumulation). Weight refs are
    # consumed directly by the dot so they stream from VMEM instead of being
    # hoisted into live vreg values.
    wy = jnp.dot(y_ref[...], wt_ref[...], preferred_element_type=jnp.float32)

    # t == 0: d_0 is identically zero -> skip the S matmul.
    thr0 = thr_ref[0]
    d = wy - jnp.clip(wy, -thr0, thr0)            # == sign(z)*relu(|z|-thr)
    out_ref[0, :, :] = d.astype(out_ref.dtype)

    # Remaining iterations, fully unrolled (num_iter is small & static).
    for t in range(1, num_iter):
        z = wy + jnp.dot(d.astype(st_dtype), st_ref[...],
                         preferred_element_type=jnp.float32)
        thr_t = thr_ref[t]
        d = z - jnp.clip(z, -thr_t, thr_t)
        out_ref[t, :, :] = d.astype(out_ref.dtype)


@functools.partial(jax.jit, static_argnames=("num_iter", "s_dtype"))
def lista_forward(y, w_weight, s_weight, thr, num_iter, s_dtype=jnp.float32):
    """y: (B, m) f32; w_weight: (n, m); s_weight: (n, n); thr: (numIter, 1)|(numIter,).

    Returns (numIter, B, n) f32: all LISTA iterates d_1 .. d_numIter.
    s_dtype=jnp.bfloat16 halves the dominant per-iteration S-weight traffic on
    v6e/v7x while keeping y/W (and hence the cached wy term) in f32.
    """
    B, m = y.shape
    n = w_weight.shape[0]

    # Pre-transpose so the kernel does plain (B,m)@(m,n) and (B,n)@(n,n).
    wt = w_weight.T.astype(jnp.float32)           # (m, n) — f32, wy stays exact
    st = s_weight.T.astype(s_dtype)               # (n, n) — per-iteration operand
    y32 = y.astype(jnp.float32)                   # (B, m)
    thr_flat = thr.reshape(-1).astype(jnp.float32)  # (numIter,)

    st_bytes = n * n * jnp.dtype(s_dtype).itemsize
    flops = 2 * B * m * n + 2 * (num_iter - 1) * B * n * n
    bytes_accessed = (y32.size * 4 + wt.size * 4 + st_bytes
                      + thr_flat.size * 4 + num_iter * B * n * 4)

    return pl.pallas_call(
        functools.partial(_lista_kernel, num_iter=num_iter),
        out_shape=jax.ShapeDtypeStruct((num_iter, B, n), jnp.float32),
        in_specs=[
            pl.BlockSpec(memory_space=pltpu.MemorySpace.SMEM),   # thr
            pl.BlockSpec(memory_space=pltpu.MemorySpace.VMEM),   # y
            pl.BlockSpec(memory_space=pltpu.MemorySpace.VMEM),   # W^T
            pl.BlockSpec(memory_space=pltpu.MemorySpace.VMEM),   # S^T
        ],
        out_specs=pl.BlockSpec(memory_space=pltpu.MemorySpace.VMEM),
        cost_estimate=pl.CostEstimate(flops=flops, transcendentals=0,
                                      bytes_accessed=bytes_accessed),
    )(thr_flat, y32, wt, st)


def lista_reference(y, w_weight, s_weight, thr, num_iter):
    """Plain-JAX reference mirroring the PyTorch forward (f32 everywhere)."""
    B = y.shape[0]
    n = w_weight.shape[0]
    thr_flat = thr.reshape(-1)
    d = jnp.zeros((B, n), jnp.float32)
    wy = y @ w_weight.T
    outs = []
    for t in range(num_iter):
        z = wy + d @ s_weight.T
        d = jnp.sign(z) * jnp.maximum(jnp.abs(z) - thr_flat[t], 0.0)
        outs.append(d)
    return jnp.stack(outs, axis=0)


if __name__ == "__main__":
    # Small, TPU-tile-friendly shapes consistent with the module:
    #   m = measurement dim, n = dictionary/code dim, B = batch.
    B, m, n = 8, 128, 256
    num_iter = 5

    key = jax.random.PRNGKey(0)
    k_a, k_y = jax.random.split(key)

    # Deterministic synthetic dictionary A (m, n) and step-size alpha,
    # mirroring LISTA.weights_init().
    A = jax.random.normal(k_a, (m, n), dtype=jnp.float32) / jnp.sqrt(m)
    alpha = 5.0
    w_weight = (1.0 / alpha) * A.T                                        # (n, m)
    s_weight = jnp.eye(n, dtype=jnp.float32) - (1.0 / alpha) * (A.T @ A)  # (n, n)
    thr = jnp.full((num_iter, 1), 0.1 / alpha, dtype=jnp.float32)         # (numIter, 1)

    y = jax.random.normal(k_y, (B, m), dtype=jnp.float32)

    ref = lista_reference(y, w_weight, s_weight, thr, num_iter)

    # --- f32 S path (tight tolerance vs reference) ---
    out = lista_forward(y, w_weight, s_weight, thr, num_iter)
    out = jax.block_until_ready(out)
    assert out.shape == (num_iter, B, n)
    assert jnp.allclose(out, ref, atol=1e-5, rtol=1e-5), "f32 mismatch vs reference"

    # --- bf16-S path (recommended default on v6e/v7x; wy stays f32) ---
    out_bf16s = lista_forward(y, w_weight, s_weight, thr, num_iter,
                              s_dtype=jnp.bfloat16)
    out_bf16s = jax.block_until_ready(out_bf16s)
    assert jnp.allclose(out_bf16s, ref, atol=3e-2, rtol=3e-2), \
        "bf16-S mismatch vs reference"

    print("KERNEL_OK")
</pallas_src>

<mosaic_0001>
module attributes {stable_mosaic.version = 11 : i64} {
  func.func @_lista_kernel(%arg0: memref<5xf32, #tpu.memory_space<smem>>, %arg1: memref<8x128xf32, #tpu.memory_space<vmem>>, %arg2: memref<128x256xf32, #tpu.memory_space<vmem>>, %arg3: memref<256x256xf32, #tpu.memory_space<vmem>>, %arg4: memref<5x8x256xf32, #tpu.memory_space<vmem>>) attributes {dimension_semantics = [], scalar_prefetch = 0 : i64, scratch_operands = 0 : i64, tpu.core_type = #tpu.core_type<tc>} {
    %c0 = arith.constant 0 : index
    %c0_0 = arith.constant 0 : index
    %0 = vector.load %arg1[%c0, %c0_0] : memref<8x128xf32, #tpu.memory_space<vmem>>, vector<8x128xf32>
    %c0_1 = arith.constant 0 : index
    %c0_2 = arith.constant 0 : index
    %1 = vector.load %arg2[%c0_1, %c0_2] : memref<128x256xf32, #tpu.memory_space<vmem>>, vector<128x256xf32>
    %cst = arith.constant dense<0.000000e+00> : vector<8x256xf32>
    %2 = tpu.matmul %0, %1, %cst {dimension_numbers = #tpu.dot_dimension_numbers<[1], [0], [0], [1], [0, 0, 1, 1], [], []>} : vector<8x128xf32>, vector<128x256xf32>, vector<8x256xf32> -> vector<8x256xf32>
    %c0_3 = arith.constant 0 : index
    %3 = memref.load %arg0[%c0_3] : memref<5xf32, #tpu.memory_space<smem>>
    %cst_4 = arith.constant 0.000000e+00 : f32
    %4 = arith.subf %cst_4, %3 : f32
    %5 = vector.broadcast %4 : f32 to vector<8x256xf32>
    %6 = arith.maximumf %5, %2 : vector<8x256xf32>
    %7 = vector.broadcast %3 : f32 to vector<8x256xf32>
    %8 = arith.minimumf %7, %6 : vector<8x256xf32>
    %9 = arith.subf %2, %8 : vector<8x256xf32>
    %c0_5 = arith.constant 0 : index
    %c0_6 = arith.constant 0 : index
    %c0_7 = arith.constant 0 : index
    %10 = vector.load %arg4[%c0_5, %c0_6, %c0_7] : memref<5x8x256xf32, #tpu.memory_space<vmem>>, vector<1x8x256xf32>
    %11 = vector.shape_cast %10 : vector<1x8x256xf32> to vector<8x256xf32>
    %12 = vector.shape_cast %9 : vector<8x256xf32> to vector<1x8x256xf32>
    tpu.vector_store %arg4[%c0_5, %c0_6, %c0_7], %12 {strides = array<i32>} : memref<5x8x256xf32, #tpu.memory_space<vmem>>, vector<1x8x256xf32>,
    %c0_8 = arith.constant 0 : index
    %c0_9 = arith.constant 0 : index
    %13 = vector.load %arg3[%c0_8, %c0_9] : memref<256x256xf32, #tpu.memory_space<vmem>>, vector<256x256xf32>
    %cst_10 = arith.constant dense<0.000000e+00> : vector<8x256xf32>
    %14 = tpu.matmul %9, %13, %cst_10 {dimension_numbers = #tpu.dot_dimension_numbers<[1], [0], [0], [1], [0, 0, 1, 1], [], []>} : vector<8x256xf32>, vector<256x256xf32>, vector<8x256xf32> -> vector<8x256xf32>
    %15 = arith.addf %2, %14 : vector<8x256xf32>
    %c1 = arith.constant 1 : index
    %16 = memref.load %arg0[%c1] : memref<5xf32, #tpu.memory_space<smem>>
    %cst_11 = arith.constant 0.000000e+00 : f32
    %17 = arith.subf %cst_11, %16 : f32
    %18 = vector.broadcast %17 : f32 to vector<8x256xf32>
    %19 = arith.maximumf %18, %15 : vector<8x256xf32>
    %20 = vector.broadcast %16 : f32 to vector<8x256xf32>
    %21 = arith.minimumf %20, %19 : vector<8x256xf32>
    %22 = arith.subf %15, %21 : vector<8x256xf32>
    %c1_12 = arith.constant 1 : index
    %c0_13 = arith.constant 0 : index
    %c0_14 = arith.constant 0 : index
    %23 = vector.load %arg4[%c1_12, %c0_13, %c0_14] : memref<5x8x256xf32, #tpu.memory_space<vmem>>, vector<1x8x256xf32>
    %24 = vector.shape_cast %23 : vector<1x8x256xf32> to vector<8x256xf32>
    %25 = vector.shape_cast %22 : vector<8x256xf32> to vector<1x8x256xf32>
    tpu.vector_store %arg4[%c1_12, %c0_13, %c0_14], %25 {strides = array<i32>} : memref<5x8x256xf32, #tpu.memory_space<vmem>>, vector<1x8x256xf32>,
    %c0_15 = arith.constant 0 : index
    %c0_16 = arith.constant 0 : index
    %26 = vector.load %arg3[%c0_15, %c0_16] : memref<256x256xf32, #tpu.memory_space<vmem>>, vector<256x256xf32>
    %cst_17 = arith.constant dense<0.000000e+00> : vector<8x256xf32>
    %27 = tpu.matmul %22, %26, %cst_17 {dimension_numbers = #tpu.dot_dimension_numbers<[1], [0], [0], [1], [0, 0, 1, 1], [], []>} : vector<8x256xf32>, vector<256x256xf32>, vector<8x256xf32> -> vector<8x256xf32>
    %28 = arith.addf %2, %27 : vector<8x256xf32>
    %c2 = arith.constant 2 : index
    %29 = memref.load %arg0[%c2] : memref<5xf32, #tpu.memory_space<smem>>
    %cst_18 = arith.constant 0.000000e+00 : f32
    %30 = arith.subf %cst_18, %29 : f32
    %31 = vector.broadcast %30 : f32 to vector<8x256xf32>
    %32 = arith.maximumf %31, %28 : vector<8x256xf32>
    %33 = vector.broadcast %29 : f32 to vector<8x256xf32>
    %34 = arith.minimumf %33, %32 : vector<8x256xf32>
    %35 = arith.subf %28, %34 : vector<8x256xf32>
    %c2_19 = arith.constant 2 : index
    %c0_20 = arith.constant 0 : index
    %c0_21 = arith.constant 0 : index
    %36 = vector.load %arg4[%c2_19, %c0_20, %c0_21] : memref<5x8x256xf32, #tpu.memory_space<vmem>>, vector<1x8x256xf32>
    %37 = vector.shape_cast %36 : vector<1x8x256xf32> to vector<8x256xf32>
    %38 = vector.shape_cast %35 : vector<8x256xf32> to vector<1x8x256xf32>
    tpu.vector_store %arg4[%c2_19, %c0_20, %c0_21], %38 {strides = array<i32>} : memref<5x8x256xf32, #tpu.memory_space<vmem>>, vector<1x8x256xf32>,
    %c0_22 = arith.constant 0 : index
    %c0_23 = arith.constant 0 : index
    %39 = vector.load %arg3[%c0_22, %c0_23] : memref<256x256xf32, #tpu.memory_space<vmem>>, vector<256x256xf32>
    %cst_24 = arith.constant dense<0.000000e+00> : vector<8x256xf32>
    %40 = tpu.matmul %35, %39, %cst_24 {dimension_numbers = #tpu.dot_dimension_numbers<[1], [0], [0], [1], [0, 0, 1, 1], [], []>} : vector<8x256xf32>, vector<256x256xf32>, vector<8x256xf32> -> vector<8x256xf32>
    %41 = arith.addf %2, %40 : vector<8x256xf32>
    %c3 = arith.constant 3 : index
    %42 = memref.load %arg0[%c3] : memref<5xf32, #tpu.memory_space<smem>>
    %cst_25 = arith.constant 0.000000e+00 : f32
    %43 = arith.subf %cst_25, %42 : f32
    %44 = vector.broadcast %43 : f32 to vector<8x256xf32>
    %45 = arith.maximumf %44, %41 : vector<8x256xf32>
    %46 = vector.broadcast %42 : f32 to vector<8x256xf32>
    %47 = arith.minimumf %46, %45 : vector<8x256xf32>
    %48 = arith.subf %41, %47 : vector<8x256xf32>
    %c3_26 = arith.constant 3 : index
    %c0_27 = arith.constant 0 : index
    %c0_28 = arith.constant 0 : index
    %49 = vector.load %arg4[%c3_26, %c0_27, %c0_28] : memref<5x8x256xf32, #tpu.memory_space<vmem>>, vector<1x8x256xf32>
    %50 = vector.shape_cast %49 : vector<1x8x256xf32> to vector<8x256xf32>
    %51 = vector.shape_cast %48 : vector<8x256xf32> to vector<1x8x256xf32>
    tpu.vector_store %arg4[%c3_26, %c0_27, %c0_28], %51 {strides = array<i32>} : memref<5x8x256xf32, #tpu.memory_space<vmem>>, vector<1x8x256xf32>,
    %c0_29 = arith.constant 0 : index
    %c0_30 = arith.constant 0 : index
    %52 = vector.load %arg3[%c0_29, %c0_30] : memref<256x256xf32, #tpu.memory_space<vmem>>, vector<256x256xf32>
    %cst_31 = arith.constant dense<0.000000e+00> : vector<8x256xf32>
    %53 = tpu.matmul %48, %52, %cst_31 {dimension_numbers = #tpu.dot_dimension_numbers<[1], [0], [0], [1], [0, 0, 1, 1], [], []>} : vector<8x256xf32>, vector<256x256xf32>, vector<8x256xf32> -> vector<8x256xf32>
    %54 = arith.addf %2, %53 : vector<8x256xf32>
    %c4 = arith.constant 4 : index
    %55 = memref.load %arg0[%c4] : memref<5xf32, #tpu.memory_space<smem>>
    %cst_32 = arith.constant 0.000000e+00 : f32
    %56 = arith.subf %cst_32, %55 : f32
    %57 = vector.broadcast %56 : f32 to vector<8x256xf32>
    %58 = arith.maximumf %57, %54 : vector<8x256xf32>
    %59 = vector.broadcast %55 : f32 to vector<8x256xf32>
    %60 = arith.minimumf %59, %58 : vector<8x256xf32>
    %61 = arith.subf %54, %60 : vector<8x256xf32>
    %c4_33 = arith.constant 4 : index
    %c0_34 = arith.constant 0 : index
    %c0_35 = arith.constant 0 : index
    %62 = vector.load %arg4[%c4_33, %c0_34, %c0_35] : memref<5x8x256xf32, #tpu.memory_space<vmem>>, vector<1x8x256xf32>
    %63 = vector.shape_cast %62 : vector<1x8x256xf32> to vector<8x256xf32>
    %64 = vector.shape_cast %61 : vector<8x256xf32> to vector<1x8x256xf32>
    tpu.vector_store %arg4[%c4_33, %c0_34, %c0_35], %64 {strides = array<i32>} : memref<5x8x256xf32, #tpu.memory_space<vmem>>, vector<1x8x256xf32>,
    return
  }
}

</mosaic_0001>

<llo_original>
// kernel: lista_forward.1
$region0: #{lista_forward.1}
  #allocation0 [shape = 'u32[]', space=smem, size = 0x4, offset = 0x4, fixed_abs, tag = 'smem constant byte address 0x4 - core index']
  #allocation1 [shape = 'u32[72,128]{1,0:T(1,128)}', space=vmem, size = 0x9000, scoped, tag = 'internal scratch']
  %s0 = inlined_call_operand.vmem [shape: f32[5], index: 0, kind: input, shape index: {}]
  %s1 = inlined_call_operand.vmem [shape: f32[8,128], index: 1, kind: input, shape index: {}]
  %s2 = inlined_call_operand.vmem [shape: f32[128,256], index: 2, kind: input, shape index: {}]
  %s3 = inlined_call_operand.vmem [shape: f32[256,256], index: 3, kind: input, shape index: {}]
  %s4 = inlined_call_operand.hbm [shape: f32[5,8,256], index: 4, kind: output, shape index: {}]
  %s5 = sld [smem:[#allocation0]]
  $region30: #{lista_forward.1} parent=0
    _
  %s7 = ssub.s32 1, %s5
  %s8 = scalar_select 0, %s7, %s5
  $region1: #{lista_forward.1} parent=0
    #allocation2 [shape = 'u8[512]{0}', space=smem, size = 0x200, scoped, tag = 'input window, operand 0, single buffered']
    #allocation3 [shape = 's32[1]{0}', space=sflag, size = 0x4, scoped, tag = 'scoped memory for lista_forward.1']
    #allocation4 [shape = 's32[1]{0}', space=sflag, size = 0x4, scoped, tag = 'scoped memory for lista_forward.1']
    #allocation5 [shape = 'u8[40960]{0}', space=vmem, size = 0xa000, scoped, tag = 'output window, operand 0, single buffered']
    %9 = vsyncpa [#allocation4], 0
    %10 = vsyncpa [#allocation3], 0
    // Predicated region
    $region2: #{lista_forward.1} parent=1 // pred_check
      _
    $region3: #{lista_forward.1} parent=1 // pred_check_branch
      %12 = sbr.rel (0) target = $region5
    $region4: #{lista_forward.1} parent=1 // pred_region
      %14 = vsyncadd [#allocation4], 0
      %s16 = sshll.u32 %s0, 4
      %s17 = int_to_ptr.vmem [resolvable:$true] %s16
      %19 = dma.vmem_to_smem %s17, 16, [#allocation2], [#allocation4]
    $region5: #{lista_forward.1} parent=1 // pred_fallthru
      _
    // Predicated region
    $region6: #{lista_forward.1} parent=1 // pred_check
      _
    $region7: #{lista_forward.1} parent=1 // pred_check_branch
      %21 = sbr.rel (0) target = $region9
    $region8: #{lista_forward.1} parent=1 // pred_region
      _
    $region9: #{lista_forward.1} parent=1 // pred_fallthru
      _
    // Predicated region
    $region10: #{lista_forward.1} parent=1 // pred_check
      _
    $region11: #{lista_forward.1} parent=1 // pred_check_branch
      %23 = sbr.rel (0) target = $region13
    $region12: #{lista_forward.1} parent=1 // pred_region
      _
    $region13: #{lista_forward.1} parent=1 // pred_fallthru
      _
    // Predicated region
    $region14: #{lista_forward.1} parent=1 // pred_check
      _
    $region15: #{lista_forward.1} parent=1 // pred_check_branch
      %25 = sbr.rel (0) target = $region17
    $region16: #{lista_forward.1} parent=1 // pred_region
      _
    $region17: #{lista_forward.1} parent=1 // pred_fallthru
      _
    // Predicated region
    $region18: #{lista_forward.1} parent=1 // pred_check
      _
    $region19: #{lista_forward.1} parent=1 // pred_check_branch
      %27 = sbr.rel (0) target = $region21
    $region20: #{lista_forward.1} parent=1 // pred_region
      %29 = dma.done [#allocation4], 16
    $region21: #{lista_forward.1} parent=1 // pred_fallthru
      _
    %30 = sfence
    %v31 = vld [vmem:[%s1] sm:$0xff]
    %v32 = vld [vmem:[%s2] sm:$0xff]
    %v33 = vld [vmem:[%s2 + $0x8] sm:$0xff]
    %v34 = vld [vmem:[%s2 + $0x10] sm:$0xff]
    %v35 = vld [vmem:[%s2 + $0x18] sm:$0xff]
    %v36 = vld [vmem:[%s2 + $0x20] sm:$0xff]
    %v37 = vld [vmem:[%s2 + $0x28] sm:$0xff]
    %v38 = vld [vmem:[%s2 + $0x30] sm:$0xff]
    %v39 = vld [vmem:[%s2 + $0x38] sm:$0xff]
    %v40 = vld [vmem:[%s2 + $0x40] sm:$0xff]
    %v41 = vld [vmem:[%s2 + $0x48] sm:$0xff]
    %v42 = vld [vmem:[%s2 + $0x50] sm:$0xff]
    %v43 = vld [vmem:[%s2 + $0x58] sm:$0xff]
    %v44 = vld [vmem:[%s2 + $0x60] sm:$0xff]
    %v45 = vld [vmem:[%s2 + $0x68] sm:$0xff]
    %v46 = vld [vmem:[%s2 + $0x70] sm:$0xff]
    %v47 = vld [vmem:[%s2 + $0x78] sm:$0xff]
    %v48 = vld [vmem:[%s2 + $0x80] sm:$0xff]
    %v49 = vld [vmem:[%s2 + $0x88] sm:$0xff]
    %v50 = vld [vmem:[%s2 + $0x90] sm:$0xff]
    %v51 = vld [vmem:[%s2 + $0x98] sm:$0xff]
    %v52 = vld [vmem:[%s2 + $0xa0] sm:$0xff]
    %v53 = vld [vmem:[%s2 + $0xa8] sm:$0xff]
    %v54 = vld [vmem:[%s2 + $0xb0] sm:$0xff]
    %v55 = vld [vmem:[%s2 + $0xb8] sm:$0xff]
    %v56 = vld [vmem:[%s2 + $0xc0] sm:$0xff]
    %v57 = vld [vmem:[%s2 + $0xc8] sm:$0xff]
    %v58 = vld [vmem:[%s2 + $0xd0] sm:$0xff]
    %v59 = vld [vmem:[%s2 + $0xd8] sm:$0xff]
    %v60 = vld [vmem:[%s2 + $0xe0] sm:$0xff]
    %v61 = vld [vmem:[%s2 + $0xe8] sm:$0xff]
    %v62 = vld [vmem:[%s2 + $0xf0] sm:$0xff]
    %v63 = vld [vmem:[%s2 + $0xf8] sm:$0xff]
    %64 = vmatpush.msra.mxu0 %v62
    %65 = vmatpush.msra.mxu0 %v60
    %66 = vmatpush.msra.mxu0 %v58
    %67 = vmatpush.msra.mxu0 %v56
    %68 = vmatpush.msra.mxu0 %v54
    %69 = vmatpush.msra.mxu0 %v52
    %70 = vmatpush.msra.mxu0 %v50
    %71 = vmatpush.msra.mxu0 %v48
    %72 = vmatpush.msra.mxu0 %v46
    %73 = vmatpush.msra.mxu0 %v44
    %74 = vmatpush.msra.mxu0 %v42
    %75 = vmatpush.msra.mxu0 %v40
    %76 = vmatpush.msra.mxu0 %v38
    %77 = vmatpush.msra.mxu0 %v36
    %78 = vmatpush.msra.mxu0 %v34
    %79 = vmatpush.msra.mxu0 %v32
    %80 = vmatmul.f32.gmra.mxu0 %v31
    %v81 = vpop.f32.mrf.mxu0
    %v82 = vadd.f32 0.0, %v81
    %83 = vdwg.mxu0
    %84 = vmatpush.msra.mxu0 %v63
    %85 = vmatpush.msra.mxu0 %v61
    %86 = vmatpush.msra.mxu0 %v59
    %87 = vmatpush.msra.mxu0 %v57
    %88 = vmatpush.msra.mxu0 %v55
    %89 = vmatpush.msra.mxu0 %v53
    %90 = vmatpush.msra.mxu0 %v51
    %91 = vmatpush.msra.mxu0 %v49
    %92 = vmatpush.msra.mxu0 %v47
    %93 = vmatpush.msra.mxu0 %v45
    %94 = vmatpush.msra.mxu0 %v43
    %95 = vmatpush.msra.mxu0 %v41
    %96 = vmatpush.msra.mxu0 %v39
    %97 = vmatpush.msra.mxu0 %v37
    %98 = vmatpush.msra.mxu0 %v35
    %99 = vmatpush.msra.mxu0 %v33
    %100 = vmatmul.f32.gmra.mxu0 %v31
    %v101 = vpop.f32.mrf.mxu0
    %v102 = vadd.f32 0.0, %v101
    %103 = vdwg.mxu0
    %s104 = sld [smem:[#allocation2]]
    %s105 = ssub.f32 0.0, %s104
    %v106 = vstv %s105
    %v107 = vmax.f32 %v106, %v82
    %v108 = vmax.f32 %v106, %v102
    %v109 = vstv %s104
    %v110 = vmin.f32 %v109, %v107
    %v111 = vmin.f32 %v109, %v108
    %v112 = vsub.f32 %v82, %v110
    %v113 = vsub.f32 %v102, %v111
    %114 = vst [vmem:[#allocation5] sm:$0xff] %v112
    %115 = vst [vmem:[#allocation5 + $0x8] sm:$0xff] %v113
    %v116 = vld [vmem:[%s3] sm:$0xff]
    %v117 = vld [vmem:[%s3 + $0x8] sm:$0xff]
    %v118 = vld [vmem:[%s3 + $0x10] sm:$0xff]
    %v119 = vld [vmem:[%s3 + $0x18] sm:$0xff]
    %v120 = vld [vmem:[%s3 + $0x20] sm:$0xff]
    %v121 = vld [vmem:[%s3 + $0x28] sm:$0xff]
    %v122 = vld [vmem:[%s3 + $0x30] sm:$0xff]
    %v123 = vld [vmem:[%s3 + $0x38] sm:$0xff]
    %v124 = vld [vmem:[%s3 + $0x40] sm:$0xff]
    %v125 = vld [vmem:[%s3 + $0x48] sm:$0xff]
    %v126 = vld [vmem:[%s3 + $0x50] sm:$0xff]
    %v127 = vld [vmem:[%s3 + $0x58] sm:$0xff]
    %v128 = vld [vmem:[%s3 + $0x60] sm:$0xff]
    %v129 = vld [vmem:[%s3 + $0x68] sm:$0xff]
    %v130 = vld [vmem:[%s3 + $0x70] sm:$0xff]
    %v131 = vld [vmem:[%s3 + $0x78] sm:$0xff]
    %v132 = vld [vmem:[%s3 + $0x80] sm:$0xff]
    %v133 = vld [vmem:[%s3 + $0x88] sm:$0xff]
    %v134 = vld [vmem:[%s3 + $0x90] sm:$0xff]
    %v135 = vld [vmem:[%s3 + $0x98] sm:$0xff]
    %v136 = vld [vmem:[%s3 + $0xa0] sm:$0xff]
    %v137 = vld [vmem:[%s3 + $0xa8] sm:$0xff]
    %v138 = vld [vmem:[%s3 + $0xb0] sm:$0xff]
    %v139 = vld [vmem:[%s3 + $0xb8] sm:$0xff]
    %v140 = vld [vmem:[%s3 + $0xc0] sm:$0xff]
    %v141 = vld [vmem:[%s3 + $0xc8] sm:$0xff]
    %v142 = vld [vmem:[%s3 + $0xd0] sm:$0xff]
    %v143 = vld [vmem:[%s3 + $0xd8] sm:$0xff]
    %v144 = vld [vmem:[%s3 + $0xe0] sm:$0xff]
    %v145 = vld [vmem:[%s3 + $0xe8] sm:$0xff]
    %v146 = vld [vmem:[%s3 + $0xf0] sm:$0xff]
    %v147 = vld [vmem:[%s3 + $0xf8] sm:$0xff]
    %v148 = vld [vmem:[%s3 + $0x100] sm:$0xff]
    %v149 = vld [vmem:[%s3 + $0x108] sm:$0xff]
    %v150 = vld [vmem:[%s3 + $0x110] sm:$0xff]
    %v151 = vld [vmem:[%s3 + $0x118] sm:$0xff]
    %v152 = vld [vmem:[%s3 + $0x120] sm:$0xff]
    %v153 = vld [vmem:[%s3 + $0x128] sm:$0xff]
    %v154 = vld [vmem:[%s3 + $0x130] sm:$0xff]
    %v155 = vld [vmem:[%s3 + $0x138] sm:$0xff]
    %v156 = vld [vmem:[%s3 + $0x140] sm:$0xff]
    %v157 = vld [vmem:[%s3 + $0x148] sm:$0xff]
    %v158 = vld [vmem:[%s3 + $0x150] sm:$0xff]
    %v159 = vld [vmem:[%s3 + $0x158] sm:$0xff]
    %v160 = vld [vmem:[%s3 + $0x160] sm:$0xff]
    %v161 = vld [vmem:[%s3 + $0x168] sm:$0xff]
    %v162 = vld [vmem:[%s3 + $0x170] sm:$0xff]
    %v163 = vld [vmem:[%s3 + $0x178] sm:$0xff]
    %v164 = vld [vmem:[%s3 + $0x180] sm:$0xff]
    %v165 = vld [vmem:[%s3 + $0x188] sm:$0xff]
    %v166 = vld [vmem:[%s3 + $0x190] sm:$0xff]
    %v167 = vld [vmem:[%s3 + $0x198] sm:$0xff]
    %v168 = vld [vmem:[%s3 + $0x1a0] sm:$0xff]
    %v169 = vld [vmem:[%s3 + $0x1a8] sm:$0xff]
    %v170 = vld [vmem:[%s3 + $0x1b0] sm:$0xff]
    %v171 = vld [vmem:[%s3 + $0x1b8] sm:$0xff]
    %v172 = vld [vmem:[%s3 + $0x1c0] sm:$0xff]
    %v173 = vld [vmem:[%s3 + $0x1c8] sm:$0xff]
    %v174 = vld [vmem:[%s3 + $0x1d0] sm:$0xff]
    %v175 = vld [vmem:[%s3 + $0x1d8] sm:$0xff]
    %v176 = vld [vmem:[%s3 + $0x1e0] sm:$0xff]
    %v177 = vld [vmem:[%s3 + $0x1e8] sm:$0xff]
    %v178 = vld [vmem:[%s3 + $0x1f0] sm:$0xff]
    %v179 = vld [vmem:[%s3 + $0x1f8] sm:$0xff]
    %180 = vmatpush.msra.mxu0 %v146
    %181 = vmatpush.msra.mxu0 %v144
    %182 = vmatpush.msra.mxu0 %v142
    %183 = vmatpush.msra.mxu0 %v140
    %184 = vmatpush.msra.mxu0 %v138
    %185 = vmatpush.msra.mxu0 %v136
    %186 = vmatpush.msra.mxu0 %v134
    %187 = vmatpush.msra.mxu0 %v132
    %188 = vmatpush.msra.mxu0 %v130
    %189 = vmatpush.msra.mxu0 %v128
    %190 = vmatpush.msra.mxu0 %v126
    %191 = vmatpush.msra.mxu0 %v124
    %192 = vmatpush.msra.mxu0 %v122
    %193 = vmatpush.msra.mxu0 %v120
    %194 = vmatpush.msra.mxu0 %v118
    %195 = vmatpush.msra.mxu0 %v116
    %196 = vmatmul.f32.gmra.mxu0 %v112
    %v197 = vpop.f32.mrf.mxu0
    %v198 = vadd.f32 0.0, %v197
    %199 = vdwg.mxu0
    %200 = vmatpush.msra.mxu0 %v178
    %201 = vmatpush.msra.mxu0 %v176
    %202 = vmatpush.msra.mxu0 %v174
    %203 = vmatpush.msra.mxu0 %v172
    %204 = vmatpush.msra.mxu0 %v170
    %205 = vmatpush.msra.mxu0 %v168
    %206 = vmatpush.msra.mxu0 %v166
    %207 = vmatpush.msra.mxu0 %v164
    %208 = vmatpush.msra.mxu0 %v162
    %209 = vmatpush.msra.mxu0 %v160
    %210 = vmatpush.msra.mxu0 %v158
    %211 = vmatpush.msra.mxu0 %v156
    %212 = vmatpush.msra.mxu0 %v154
    %213 = vmatpush.msra.mxu0 %v152
    %214 = vmatpush.msra.mxu0 %v150
    %215 = vmatpush.msra.mxu0 %v148
    %216 = vmatmul.f32.gmra.mxu0 %v113
    %v217 = vpop.f32.mrf.mxu0
    %v218 = vadd.f32 %v198, %v217
    %219 = vdwg.mxu0
    %220 = vmatpush.msra.mxu0 %v147
    %221 = vmatpush.msra.mxu0 %v145
    %222 = vmatpush.msra.mxu0 %v143
    %223 = vmatpush.msra.mxu0 %v141
    %224 = vmatpush.msra.mxu0 %v139
    %225 = vmatpush.msra.mxu0 %v137
    %226 = vmatpush.msra.mxu0 %v135
    %227 = vmatpush.msra.mxu0 %v133
    %228 = vmatpush.msra.mxu0 %v131
    %229 = vmatpush.msra.mxu0 %v129
    %230 = vmatpush.msra.mxu0 %v127
    %231 = vmatpush.msra.mxu0 %v125
    %232 = vmatpush.msra.mxu0 %v123
    %233 = vmatpush.msra.mxu0 %v121
    %234 = vmatpush.msra.mxu0 %v119
    %235 = vmatpush.msra.mxu0 %v117
    %236 = vmatmul.f32.gmra.mxu0 %v112
    %v237 = vpop.f32.mrf.mxu0
    %v238 = vadd.f32 0.0, %v237
    %239 = vdwg.mxu0
    %240 = vmatpush.msra.mxu0 %v179
    %241 = vmatpush.msra.mxu0 %v177
    %242 = vmatpush.msra.mxu0 %v175
    %243 = vmatpush.msra.mxu0 %v173
    %244 = vmatpush.msra.mxu0 %v171
    %245 = vmatpush.msra.mxu0 %v169
    %246 = vmatpush.msra.mxu0 %v167
    %247 = vmatpush.msra.mxu0 %v165
    %248 = vmatpush.msra.mxu0 %v163
    %249 = vmatpush.msra.mxu0 %v161
    %250 = vmatpush.msra.mxu0 %v159
    %251 = vmatpush.msra.mxu0 %v157
    %252 = vmatpush.msra.mxu0 %v155
    %253 = vmatpush.msra.mxu0 %v153
    %254 = vmatpush.msra.mxu0 %v151
    %255 = vmatpush.msra.mxu0 %v149
    %256 = vmatmul.f32.gmra.mxu0 %v113
    %v257 = vpop.f32.mrf.mxu0
    %v258 = vadd.f32 %v238, %v257
    %259 = vdwg.mxu0
    %v260 = vadd.f32 %v82, %v218
    %v261 = vadd.f32 %v102, %v258
    %s262 = sld [smem:[#allocation2 + $0x1]]
    %s263 = ssub.f32 0.0, %s262
    %v264 = vstv %s263
    %v265 = vmax.f32 %v264, %v260
    %v266 = vmax.f32 %v264, %v261
    %v267 = vstv %s262
    %v268 = vmin.f32 %v267, %v265
    %v269 = vmin.f32 %v267, %v266
    %v270 = vsub.f32 %v260, %v268
    %v271 = vsub.f32 %v261, %v269
    %s272 = scalar_lea.vmem [#allocation5], 16
    %273 = vst [vmem:[%s272] sm:$0xff] %v270
    %274 = vst [vmem:[%s272 + $0x8] sm:$0xff] %v271
    %v275 = vld [vmem:[%s3] sm:$0xff]
    %v276 = vld [vmem:[%s3 + $0x8] sm:$0xff]
    %v277 = vld [vmem:[%s3 + $0x10] sm:$0xff]
    %v278 = vld [vmem:[%s3 + $0x18] sm:$0xff]
    %v279 = vld [vmem:[%s3 + $0x20] sm:$0xff]
    %v280 = vld [vmem:[%s3 + $0x28] sm:$0xff]
    %v281 = vld [vmem:[%s3 + $0x30] sm:$0xff]
    %v282 = vld [vmem:[%s3 + $0x38] sm:$0xff]
    %v283 = vld [vmem:[%s3 + $0x40] sm:$0xff]
    %v284 = vld [vmem:[%s3 + $0x48] sm:$0xff]
    %v285 = vld [vmem:[%s3 + $0x50] sm:$0xff]
    %v286 = vld [vmem:[%s3 + $0x58] sm:$0xff]
    %v287 = vld [vmem:[%s3 + $0x60] sm:$0xff]
    %v288 = vld [vmem:[%s3 + $0x68] sm:$0xff]
    %v289 = vld [vmem:[%s3 + $0x70] sm:$0xff]
    %v290 = vld [vmem:[%s3 + $0x78] sm:$0xff]
    %v291 = vld [vmem:[%s3 + $0x80] sm:$0xff]
    %v292 = vld [vmem:[%s3 + $0x88] sm:$0xff]
    %v293 = vld [vmem:[%s3 + $0x90] sm:$0xff]
    %v294 = vld [vmem:[%s3 + $0x98] sm:$0xff]
    %v295 = vld [vmem:[%s3 + $0xa0] sm:$0xff]
    %v296 = vld [vmem:[%s3 + $0xa8] sm:$0xff]
    %v297 = vld [vmem:[%s3 + $0xb0] sm:$0xff]
    %v298 = vld [vmem:[%s3 + $0xb8] sm:$0xff]
    %v299 = vld [vmem:[%s3 + $0xc0] sm:$0xff]
    %v300 = vld [vmem:[%s3 + $0xc8] sm:$0xff]
    %v301 = vld [vmem:[%s3 + $0xd0] sm:$0xff]
    %v302 = vld [vmem:[%s3 + $0xd8] sm:$0xff]
    %v303 = vld [vmem:[%s3 + $0xe0] sm:$0xff]
    %v304 = vld [vmem:[%s3 + $0xe8] sm:$0xff]
    %v305 = vld [vmem:[%s3 + $0xf0] sm:$0xff]
    %v306 = vld [vmem:[%s3 + $0xf8] sm:$0xff]
    %v307 = vld [vmem:[%s3 + $0x100] sm:$0xff]
    %v308 = vld [vmem:[%s3 + $0x108] sm:$0xff]
    %v309 = vld [vmem:[%s3 + $0x110] sm:$0xff]
    %v310 = vld [vmem:[%s3 + $0x118] sm:$0xff]
    %v311 = vld [vmem:[%s3 + $0x120] sm:$0xff]
    %v312 = vld [vmem:[%s3 + $0x128] sm:$0xff]
    %v313 = vld [vmem:[%s3 + $0x130] sm:$0xff]
    %v314 = vld [vmem:[%s3 + $0x138] sm:$0xff]
    %v315 = vld [vmem:[%s3 + $0x140] sm:$0xff]
    %v316 = vld [vmem:[%s3 + $0x148] sm:$0xff]
    %v317 = vld [vmem:[%s3 + $0x150] sm:$0xff]
    %v318 = vld [vmem:[%s3 + $0x158] sm:$0xff]
    %v319 = vld [vmem:[%s3 + $0x160] sm:$0xff]
    %v320 = vld [vmem:[%s3 + $0x168] sm:$0xff]
    %v321 = vld [vmem:[%s3 + $0x170] sm:$0xff]
    %v322 = vld [vmem:[%s3 + $0x178] sm:$0xff]
    %v323 = vld [vmem:[%s3 + $0x180] sm:$0xff]
    %v324 = vld [vmem:[%s3 + $0x188] sm:$0xff]
    %v325 = vld [vmem:[%s3 + $0x190] sm:$0xff]
    %v326 = vld [vmem:[%s3 + $0x198] sm:$0xff]
    %v327 = vld [vmem:[%s3 + $0x1a0] sm:$0xff]
    %v328 = vld [vmem:[%s3 + $0x1a8] sm:$0xff]
    %v329 = vld [vmem:[%s3 + $0x1b0] sm:$0xff]
    %v330 = vld [vmem:[%s3 + $0x1b8] sm:$0xff]
    %v331 = vld [vmem:[%s3 + $0x1c0] sm:$0xff]
    %v332 = vld [vmem:[%s3 + $0x1c8] sm:$0xff]
    %v333 = vld [vmem:[%s3 + $0x1d0] sm:$0xff]
    %v334 = vld [vmem:[%s3 + $0x1d8] sm:$0xff]
    %v335 = vld [vmem:[%s3 + $0x1e0] sm:$0xff]
    %v336 = vld [vmem:[%s3 + $0x1e8] sm:$0xff]
    %v337 = vld [vmem:[%s3 + $0x1f0] sm:$0xff]
    %v338 = vld [vmem:[%s3 + $0x1f8] sm:$0xff]
    %339 = vmatpush.msra.mxu0 %v305
    %340 = vmatpush.msra.mxu0 %v303
    %341 = vmatpush.msra.mxu0 %v301
    %342 = vmatpush.msra.mxu0 %v299
    %343 = vmatpush.msra.mxu0 %v297
    %344 = vmatpush.msra.mxu0 %v295
    %345 = vmatpush.msra.mxu0 %v293
    %346 = vmatpush.msra.mxu0 %v291
    %347 = vmatpush.msra.mxu0 %v289
    %348 = vmatpush.msra.mxu0 %v287
    %349 = vmatpush.msra.mxu0 %v285
    %350 = vmatpush.msra.mxu0 %v283
    %351 = vmatpush.msra.mxu0 %v281
    %352 = vmatpush.msra.mxu0 %v279
    %353 = vmatpush.msra.mxu0 %v277
    %354 = vmatpush.msra.mxu0 %v275
    %355 = vmatmul.f32.gmra.mxu0 %v270
    %v356 = vpop.f32.mrf.mxu0
    %v357 = vadd.f32 0.0, %v356
    %358 = vdwg.mxu0
    %359 = vmatpush.msra.mxu0 %v337
    %360 = vmatpush.msra.mxu0 %v335
    %361 = vmatpush.msra.mxu0 %v333
    %362 = vmatpush.msra.mxu0 %v331
    %363 = vmatpush.msra.mxu0 %v329
    %364 = vmatpush.msra.mxu0 %v327
    %365 = vmatpush.msra.mxu0 %v325
    %366 = vmatpush.msra.mxu0 %v323
    %367 = vmatpush.msra.mxu0 %v321
    %368 = vmatpush.msra.mxu0 %v319
    %369 = vmatpush.msra.mxu0 %v317
    %370 = vmatpush.msra.mxu0 %v315
    %371 = vmatpush.msra.mxu0 %v313
    %372 = vmatpush.msra.mxu0 %v311
    %373 = vmatpush.msra.mxu0 %v309
    %374 = vmatpush.msra.mxu0 %v307
    %375 = vmatmul.f32.gmra.mxu0 %v271
    %v376 = vpop.f32.mrf.mxu0
    %v377 = vadd.f32 %v357, %v376
    %378 = vdwg.mxu0
    %379 = vmatpush.msra.mxu0 %v306
    %380 = vmatpush.msra.mxu0 %v304
    %381 = vmatpush.msra.mxu0 %v302
    %382 = vmatpush.msra.mxu0 %v300
    %383 = vmatpush.msra.mxu0 %v298
    %384 = vmatpush.msra.mxu0 %v296
    %385 = vmatpush.msra.mxu0 %v294
    %386 = vmatpush.msra.mxu0 %v292
    %387 = vmatpush.msra.mxu0 %v290
    %388 = vmatpush.msra.mxu0 %v288
    %389 = vmatpush.msra.mxu0 %v286
    %390 = vmatpush.msra.mxu0 %v284
    %391 = vmatpush.msra.mxu0 %v282
    %392 = vmatpush.msra.mxu0 %v280
    %393 = vmatpush.msra.mxu0 %v278
    %394 = vmatpush.msra.mxu0 %v276
    %395 = vmatmul.f32.gmra.mxu0 %v270
    %v396 = vpop.f32.mrf.mxu0
    %v397 = vadd.f32 0.0, %v396
    %398 = vdwg.mxu0
    %399 = vmatpush.msra.mxu0 %v338
    %400 = vmatpush.msra.mxu0 %v336
    %401 = vmatpush.msra.mxu0 %v334
    %402 = vmatpush.msra.mxu0 %v332
    %403 = vmatpush.msra.mxu0 %v330
    %404 = vmatpush.msra.mxu0 %v328
    %405 = vmatpush.msra.mxu0 %v326
    %406 = vmatpush.msra.mxu0 %v324
    %407 = vmatpush.msra.mxu0 %v322
    %408 = vmatpush.msra.mxu0 %v320
    %409 = vmatpush.msra.mxu0 %v318
    %410 = vmatpush.msra.mxu0 %v316
    %411 = vmatpush.msra.mxu0 %v314
    %412 = vmatpush.msra.mxu0 %v312
    %413 = vmatpush.msra.mxu0 %v310
    %414 = vmatpush.msra.mxu0 %v308
    %415 = vmatmul.f32.gmra.mxu0 %v271
    %v416 = vpop.f32.mrf.mxu0
    %v417 = vadd.f32 %v397, %v416
    %418 = vdwg.mxu0
    %v419 = vadd.f32 %v82, %v377
    %v420 = vadd.f32 %v102, %v417
    %s421 = sld [smem:[#allocation2 + $0x2]]
    %s422 = ssub.f32 0.0, %s421
    %v423 = vstv %s422
    %v424 = vmax.f32 %v423, %v419
    %v425 = vmax.f32 %v423, %v420
    %v426 = vstv %s421
    %v427 = vmin.f32 %v426, %v424
    %v428 = vmin.f32 %v426, %v425
    %v429 = vsub.f32 %v419, %v427
    %v430 = vsub.f32 %v420, %v428
    %s431 = scalar_lea.vmem [#allocation5], 32
    %432 = vst [vmem:[%s431] sm:$0xff] %v429
    %433 = vst [vmem:[%s431 + $0x8] sm:$0xff] %v430
    %v434 = vld [vmem:[%s3] sm:$0xff]
    %v435 = vld [vmem:[%s3 + $0x8] sm:$0xff]
    %v436 = vld [vmem:[%s3 + $0x10] sm:$0xff]
    %v437 = vld [vmem:[%s3 + $0x18] sm:$0xff]
    %v438 = vld [vmem:[%s3 + $0x20] sm:$0xff]
    %v439 = vld [vmem:[%s3 + $0x28] sm:$0xff]
    %v440 = vld [vmem:[%s3 + $0x30] sm:$0xff]
    %v441 = vld [vmem:[%s3 + $0x38] sm:$0xff]
    %v442 = vld [vmem:[%s3 + $0x40] sm:$0xff]
    %v443 = vld [vmem:[%s3 + $0x48] sm:$0xff]
    %v444 = vld [vmem:[%s3 + $0x50] sm:$0xff]
    %v445 = vld [vmem:[%s3 + $0x58] sm:$0xff]
    %v446 = vld [vmem:[%s3 + $0x60] sm:$0xff]
    %v447 = vld [vmem:[%s3 + $0x68] sm:$0xff]
    %v448 = vld [vmem:[%s3 + $0x70] sm:$0xff]
    %v449 = vld [vmem:[%s3 + $0x78] sm:$0xff]
    %v450 = vld [vmem:[%s3 + $0x80] sm:$0xff]
    %v451 = vld [vmem:[%s3 + $0x88] sm:$0xff]
    %v452 = vld [vmem:[%s3 + $0x90] sm:$0xff]
    %v453 = vld [vmem:[%s3 + $0x98] sm:$0xff]
    %v454 = vld [vmem:[%s3 + $0xa0] sm:$0xff]
    %v455 = vld [vmem:[%s3 + $0xa8] sm:$0xff]
    %v456 = vld [vmem:[%s3 + $0xb0] sm:$0xff]
    %v457 = vld [vmem:[%s3 + $0xb8] sm:$0xff]
    %v458 = vld [vmem:[%s3 + $0xc0] sm:$0xff]
    %v459 = vld [vmem:[%s3 + $0xc8] sm:$0xff]
    %v460 = vld [vmem:[%s3 + $0xd0] sm:$0xff]
    %v461 = vld [vmem:[%s3 + $0xd8] sm:$0xff]
    %v462 = vld [vmem:[%s3 + $0xe0] sm:$0xff]
    %v463 = vld [vmem:[%s3 + $0xe8] sm:$0xff]
    %v464 = vld [vmem:[%s3 + $0xf0] sm:$0xff]
    %v465 = vld [vmem:[%s3 + $0xf8] sm:$0xff]
    %v466 = vld [vmem:[%s3 + $0x100] sm:$0xff]
    %v467 = vld [vmem:[%s3 + $0x108] sm:$0xff]
    %v468 = vld [vmem:[%s3 + $0x110] sm:$0xff]
    %v469 = vld [vmem:[%s3 + $0x118] sm:$0xff]
    %v470 = vld [vmem:[%s3 + $0x120] sm:$0xff]
    %v471 = vld [vmem:[%s3 + $0x128] sm:$0xff]
    %v472 = vld [vmem:[%s3 + $0x130] sm:$0xff]
    %v473 = vld [vmem:[%s3 + $0x138] sm:$0xff]
    %v474 = vld [vmem:[%s3 + $0x140] sm:$0xff]
    %v475 = vld [vmem:[%s3 + $0x148] sm:$0xff]
    %v476 = vld [vmem:[%s3 + $0x150] sm:$0xff]
    %v477 = vld [vmem:[%s3 + $0x158] sm:$0xff]
    %v478 = vld [vmem:[%s3 + $0x160] sm:$0xff]
    %v479 = vld [vmem:[%s3 + $0x168] sm:$0xff]
    %v480 = vld [vmem:[%s3 + $0x170] sm:$0xff]
    %v481 = vld [vmem:[%s3 + $0x178] sm:$0xff]
    %v482 = vld [vmem:[%s3 + $0x180] sm:$0xff]
    %v483 = vld [vmem:[%s3 + $0x188] sm:$0xff]
    %v484 = vld [vmem:[%s3 + $0x190] sm:$0xff]
    %v485 = vld [vmem:[%s3 + $0x198] sm:$0xff]
    %v486 = vld [vmem:[%s3 + $0x1a0] sm:$0xff]
    %v487 = vld [vmem:[%s3 + $0x1a8] sm:$0xff]
    %v488 = vld [vmem:[%s3 + $0x1b0] sm:$0xff]
    %v489 = vld [vmem:[%s3 + $0x1b8] sm:$0xff]
    %v490 = vld [vmem:[%s3 + $0x1c0] sm:$0xff]
    %v491 = vld [vmem:[%s3 + $0x1c8] sm:$0xff]
    %v492 = vld [vmem:[%s3 + $0x1d0] sm:$0xff]
    %v493 = vld [vmem:[%s3 + $0x1d8] sm:$0xff]
    %v494 = vld [vmem:[%s3 + $0x1e0] sm:$0xff]
    %v495 = vld [vmem:[%s3 + $0x1e8] sm:$0xff]
    %v496 = vld [vmem:[%s3 + $0x1f0] sm:$0xff]
    %v497 = vld [vmem:[%s3 + $0x1f8] sm:$0xff]
    %498 = vmatpush.msra.mxu0 %v464
    %499 = vmatpush.msra.mxu0 %v462
    %500 = vmatpush.msra.mxu0 %v460
    %501 = vmatpush.msra.mxu0 %v458
    %502 = vmatpush.msra.mxu0 %v456
    %503 = vmatpush.msra.mxu0 %v454
    %504 = vmatpush.msra.mxu0 %v452
    %505 = vmatpush.msra.mxu0 %v450
    %506 = vmatpush.msra.mxu0 %v448
    %507 = vmatpush.msra.mxu0 %v446
    %508 = vmatpush.msra.mxu0 %v444
    %509 = vmatpush.msra.mxu0 %v442
    %510 = vmatpush.msra.mxu0 %v440
    %511 = vmatpush.msra.mxu0 %v438
    %512 = vmatpush.msra.mxu0 %v436
    %513 = vmatpush.msra.mxu0 %v434
    %514 = vmatmul.f32.gmra.mxu0 %v429
    %v515 = vpop.f32.mrf.mxu0
    %v516 = vadd.f32 0.0, %v515
    %517 = vdwg.mxu0
    %518 = vmatpush.msra.mxu0 %v496
    %519 = vmatpush.msra.mxu0 %v494
    %520 = vmatpush.msra.mxu0 %v492
    %521 = vmatpush.msra.mxu0 %v490
    %522 = vmatpush.msra.mxu0 %v488
    %523 = vmatpush.msra.mxu0 %v486
    %524 = vmatpush.msra.mxu0 %v484
    %525 = vmatpush.msra.mxu0 %v482
    %526 = vmatpush.msra.mxu0 %v480
    %527 = vmatpush.msra.mxu0 %v478
    %528 = vmatpush.msra.mxu0 %v476
    %529 = vmatpush.msra.mxu0 %v474
    %530 = vmatpush.msra.mxu0 %v472
    %531 = vmatpush.msra.mxu0 %v470
    %532 = vmatpush.msra.mxu0 %v468
    %533 = vmatpush.msra.mxu0 %v466
    %534 = vmatmul.f32.gmra.mxu0 %v430
    %v535 = vpop.f32.mrf.mxu0
    %v536 = vadd.f32 %v516, %v535
    %537 = vdwg.mxu0
    %538 = vmatpush.msra.mxu0 %v465
    %539 = vmatpush.msra.mxu0 %v463
    %540 = vmatpush.msra.mxu0 %v461
    %541 = vmatpush.msra.mxu0 %v459
    %542 = vmatpush.msra.mxu0 %v457
    %543 = vmatpush.msra.mxu0 %v455
    %544 = vmatpush.msra.mxu0 %v453
    %545 = vmatpush.msra.mxu0 %v451
    %546 = vmatpush.msra.mxu0 %v449
    %547 = vmatpush.msra.mxu0 %v447
    %548 = vmatpush.msra.mxu0 %v445
    %549 = vmatpush.msra.mxu0 %v443
    %550 = vmatpush.msra.mxu0 %v441
    %551 = vmatpush.msra.mxu0 %v439
    %552 = vmatpush.msra.mxu0 %v437
    %553 = vmatpush.msra.mxu0 %v435
    %554 = vmatmul.f32.gmra.mxu0 %v429
    %v555 = vpop.f32.mrf.mxu0
    %v556 = vadd.f32 0.0, %v555
    %557 = vdwg.mxu0
    %558 = vmatpush.msra.mxu0 %v497
    %559 = vmatpush.msra.mxu0 %v495
    %560 = vmatpush.msra.mxu0 %v493
    %561 = vmatpush.msra.mxu0 %v491
    %562 = vmatpush.msra.mxu0 %v489
    %563 = vmatpush.msra.mxu0 %v487
    %564 = vmatpush.msra.mxu0 %v485
    %565 = vmatpush.msra.mxu0 %v483
    %566 = vmatpush.msra.mxu0 %v481
    %567 = vmatpush.msra.mxu0 %v479
    %568 = vmatpush.msra.mxu0 %v477
    %569 = vmatpush.msra.mxu0 %v475
    %570 = vmatpush.msra.mxu0 %v473
    %571 = vmatpush.msra.mxu0 %v471
    %572 = vmatpush.msra.mxu0 %v469
    %573 = vmatpush.msra.mxu0 %v467
    %574 = vmatmul.f32.gmra.mxu0 %v430
    %v575 = vpop.f32.mrf.mxu0
    %v576 = vadd.f32 %v556, %v575
    %577 = vdwg.mxu0
    %v578 = vadd.f32 %v82, %v536
    %v579 = vadd.f32 %v102, %v576
    %s580 = sld [smem:[#allocation2 + $0x3]]
    %s581 = ssub.f32 0.0, %s580
    %v582 = vstv %s581
    %v583 = vmax.f32 %v582, %v578
    %v584 = vmax.f32 %v582, %v579
    %v585 = vstv %s580
    %v586 = vmin.f32 %v585, %v583
    %v587 = vmin.f32 %v585, %v584
    %v588 = vsub.f32 %v578, %v586
    %v589 = vsub.f32 %v579, %v587
    %s590 = scalar_lea.vmem [#allocation5], 48
    %591 = vst [vmem:[%s590] sm:$0xff] %v588
    %592 = vst [vmem:[%s590 + $0x8] sm:$0xff] %v589
    %v593 = vld [vmem:[%s3] sm:$0xff]
    %v594 = vld [vmem:[%s3 + $0x8] sm:$0xff]
    %v595 = vld [vmem:[%s3 + $0x10] sm:$0xff]
    %v596 = vld [vmem:[%s3 + $0x18] sm:$0xff]
    %v597 = vld [vmem:[%s3 + $0x20] sm:$0xff]
    %v598 = vld [vmem:[%s3 + $0x28] sm:$0xff]
    %v599 = vld [vmem:[%s3 + $0x30] sm:$0xff]
    %v600 = vld [vmem:[%s3 + $0x38] sm:$0xff]
    %v601 = vld [vmem:[%s3 + $0x40] sm:$0xff]
    %v602 = vld [vmem:[%s3 + $0x48] sm:$0xff]
    %v603 = vld [vmem:[%s3 + $0x50] sm:$0xff]
    %v604 = vld [vmem:[%s3 + $0x58] sm:$0xff]
    %v605 = vld [vmem:[%s3 + $0x60] sm:$0xff]
    %v606 = vld [vmem:[%s3 + $0x68] sm:$0xff]
    %v607 = vld [vmem:[%s3 + $0x70] sm:$0xff]
    %v608 = vld [vmem:[%s3 + $0x78] sm:$0xff]
    %v609 = vld [vmem:[%s3 + $0x80] sm:$0xff]
    %v610 = vld [vmem:[%s3 + $0x88] sm:$0xff]
    %v611 = vld [vmem:[%s3 + $0x90] sm:$0xff]
    %v612 = vld [vmem:[%s3 + $0x98] sm:$0xff]
    %v613 = vld [vmem:[%s3 + $0xa0] sm:$0xff]
    %v614 = vld [vmem:[%s3 + $0xa8] sm:$0xff]
    %v615 = vld [vmem:[%s3 + $0xb0] sm:$0xff]
    %v616 = vld [vmem:[%s3 + $0xb8] sm:$0xff]
    %v617 = vld [vmem:[%s3 + $0xc0] sm:$0xff]
    %v618 = vld [vmem:[%s3 + $0xc8] sm:$0xff]
    %v619 = vld [vmem:[%s3 + $0xd0] sm:$0xff]
    %v620 = vld [vmem:[%s3 + $0xd8] sm:$0xff]
    %v621 = vld [vmem:[%s3 + $0xe0] sm:$0xff]
    %v622 = vld [vmem:[%s3 + $0xe8] sm:$0xff]
    %v623 = vld [vmem:[%s3 + $0xf0] sm:$0xff]
    %v624 = vld [vmem:[%s3 + $0xf8] sm:$0xff]
    %v625 = vld [vmem:[%s3 + $0x100] sm:$0xff]
    %v626 = vld [vmem:[%s3 + $0x108] sm:$0xff]
    %v627 = vld [vmem:[%s3 + $0x110] sm:$0xff]
    %v628 = vld [vmem:[%s3 + $0x118] sm:$0xff]
    %v629 = vld [vmem:[%s3 + $0x120] sm:$0xff]
    %v630 = vld [vmem:[%s3 + $0x128] sm:$0xff]
    %v631 = vld [vmem:[%s3 + $0x130] sm:$0xff]
    %v632 = vld [vmem:[%s3 + $0x138] sm:$0xff]
    %v633 = vld [vmem:[%s3 + $0x140] sm:$0xff]
    %v634 = vld [vmem:[%s3 + $0x148] sm:$0xff]
    %v635 = vld [vmem:[%s3 + $0x150] sm:$0xff]
    %v636 = vld [vmem:[%s3 + $0x158] sm:$0xff]
    %v637 = vld [vmem:[%s3 + $0x160] sm:$0xff]
    %v638 = vld [vmem:[%s3 + $0x168] sm:$0xff]
    %v639 = vld [vmem:[%s3 + $0x170] sm:$0xff]
    %v640 = vld [vmem:[%s3 + $0x178] sm:$0xff]
    %v641 = vld [vmem:[%s3 + $0x180] sm:$0xff]
    %v642 = vld [vmem:[%s3 + $0x188] sm:$0xff]
    %v643 = vld [vmem:[%s3 + $0x190] sm:$0xff]
    %v644 = vld [vmem:[%s3 + $0x198] sm:$0xff]
    %v645 = vld [vmem:[%s3 + $0x1a0] sm:$0xff]
    %v646 = vld [vmem:[%s3 + $0x1a8] sm:$0xff]
    %v647 = vld [vmem:[%s3 + $0x1b0] sm:$0xff]
    %v648 = vld [vmem:[%s3 + $0x1b8] sm:$0xff]
    %v649 = vld [vmem:[%s3 + $0x1c0] sm:$0xff]
    %v650 = vld [vmem:[%s3 + $0x1c8] sm:$0xff]
    %v651 = vld [vmem:[%s3 + $0x1d0] sm:$0xff]
    %v652 = vld [vmem:[%s3 + $0x1d8] sm:$0xff]
    %v653 = vld [vmem:[%s3 + $0x1e0] sm:$0xff]
    %v654 = vld [vmem:[%s3 + $0x1e8] sm:$0xff]
    %v655 = vld [vmem:[%s3 + $0x1f0] sm:$0xff]
    %v656 = vld [vmem:[%s3 + $0x1f8] sm:$0xff]
    %657 = vmatpush.msra.mxu0 %v623
    %658 = vmatpush.msra.mxu0 %v621
    %659 = vmatpush.msra.mxu0 %v619
    %660 = vmatpush.msra.mxu0 %v617
    %661 = vmatpush.msra.mxu0 %v615
    %662 = vmatpush.msra.mxu0 %v613
    %663 = vmatpush.msra.mxu0 %v611
    %664 = vmatpush.msra.mxu0 %v609
    %665 = vmatpush.msra.mxu0 %v607
    %666 = vmatpush.msra.mxu0 %v605
    %667 = vmatpush.msra.mxu0 %v603
    %668 = vmatpush.msra.mxu0 %v601
    %669 = vmatpush.msra.mxu0 %v599
    %670 = vmatpush.msra.mxu0 %v597
    %671 = vmatpush.msra.mxu0 %v595
    %672 = vmatpush.msra.mxu0 %v593
    %673 = vmatmul.f32.gmra.mxu0 %v588
    %v674 = vpop.f32.mrf.mxu0
    %v675 = vadd.f32 0.0, %v674
    %676 = vdwg.mxu0
    %677 = vmatpush.msra.mxu0 %v655
    %678 = vmatpush.msra.mxu0 %v653
    %679 = vmatpush.msra.mxu0 %v651
    %680 = vmatpush.msra.mxu0 %v649
    %681 = vmatpush.msra.mxu0 %v647
    %682 = vmatpush.msra.mxu0 %v645
    %683 = vmatpush.msra.mxu0 %v643
    %684 = vmatpush.msra.mxu0 %v641
    %685 = vmatpush.msra.mxu0 %v639
    %686 = vmatpush.msra.mxu0 %v637
    %687 = vmatpush.msra.mxu0 %v635
    %688 = vmatpush.msra.mxu0 %v633
    %689 = vmatpush.msra.mxu0 %v631
    %690 = vmatpush.msra.mxu0 %v629
    %691 = vmatpush.msra.mxu0 %v627
    %692 = vmatpush.msra.mxu0 %v625
    %693 = vmatmul.f32.gmra.mxu0 %v589
    %v694 = vpop.f32.mrf.mxu0
    %v695 = vadd.f32 %v675, %v694
    %696 = vdwg.mxu0
    %697 = vmatpush.msra.mxu0 %v624
    %698 = vmatpush.msra.mxu0 %v622
    %699 = vmatpush.msra.mxu0 %v620
    %700 = vmatpush.msra.mxu0 %v618
    %701 = vmatpush.msra.mxu0 %v616
    %702 = vmatpush.msra.mxu0 %v614
    %703 = vmatpush.msra.mxu0 %v612
    %704 = vmatpush.msra.mxu0 %v610
    %705 = vmatpush.msra.mxu0 %v608
    %706 = vmatpush.msra.mxu0 %v606
    %707 = vmatpush.msra.mxu0 %v604
    %708 = vmatpush.msra.mxu0 %v602
    %709 = vmatpush.msra.mxu0 %v600
    %710 = vmatpush.msra.mxu0 %v598
    %711 = vmatpush.msra.mxu0 %v596
    %712 = vmatpush.msra.mxu0 %v594
    %713 = vmatmul.f32.gmra.mxu0 %v588
    %v714 = vpop.f32.mrf.mxu0
    %v715 = vadd.f32 0.0, %v714
    %716 = vdwg.mxu0
    %717 = vmatpush.msra.mxu0 %v656
    %718 = vmatpush.msra.mxu0 %v654
    %719 = vmatpush.msra.mxu0 %v652
    %720 = vmatpush.msra.mxu0 %v650
    %721 = vmatpush.msra.mxu0 %v648
    %722 = vmatpush.msra.mxu0 %v646
    %723 = vmatpush.msra.mxu0 %v644
    %724 = vmatpush.msra.mxu0 %v642
    %725 = vmatpush.msra.mxu0 %v640
    %726 = vmatpush.msra.mxu0 %v638
    %727 = vmatpush.msra.mxu0 %v636
    %728 = vmatpush.msra.mxu0 %v634
    %729 = vmatpush.msra.mxu0 %v632
    %730 = vmatpush.msra.mxu0 %v630
    %731 = vmatpush.msra.mxu0 %v628
    %732 = vmatpush.msra.mxu0 %v626
    %733 = vmatmul.f32.gmra.mxu0 %v589
    %v734 = vpop.f32.mrf.mxu0
    %v735 = vadd.f32 %v715, %v734
    %736 = vdwg.mxu0
    %v737 = vadd.f32 %v82, %v695
    %v738 = vadd.f32 %v102, %v735
    %s739 = sld [smem:[#allocation2 + $0x4]]
    %s740 = ssub.f32 0.0, %s739
    %v741 = vstv %s740
    %v742 = vmax.f32 %v741, %v737
    %v743 = vmax.f32 %v741, %v738
    %v744 = vstv %s739
    %v745 = vmin.f32 %v744, %v742
    %v746 = vmin.f32 %v744, %v743
    %v747 = vsub.f32 %v737, %v745
    %v748 = vsub.f32 %v738, %v746
    %s749 = scalar_lea.vmem [#allocation5], 64
    %750 = vst [vmem:[%s749] sm:$0xff] %v747
    %751 = vst [vmem:[%s749 + $0x8] sm:$0xff] %v748
    // Predicated region
    $region22: #{lista_forward.1} parent=1 // pred_check
      _
    $region23: #{lista_forward.1} parent=1 // pred_check_branch
      %753 = sbr.rel (0) target = $region25
    $region24: #{lista_forward.1} parent=1 // pred_region
      %755 = vsyncadd [#allocation3], 0
      %s756 = sshll.u32 [#allocation5], 4
      %s757 = int_to_ptr.vmem [resolvable:$true] %s756
      %s758 = sshll.u32 %s4, 4
      %s759 = int_to_ptr.hbm [resolvable:$true] %s758
      %764 = dma.vmem_to_hbm [thread:$0]  %s757, 1280, %s759, [#allocation3], 256, 256, 16
    $region25: #{lista_forward.1} parent=1 // pred_fallthru
      _
    // Predicated region
    $region26: #{lista_forward.1} parent=1 // pred_check
      _
    $region27: #{lista_forward.1} parent=1 // pred_check_branch
      %766 = sbr.rel (0) target = $region29
    $region28: #{lista_forward.1} parent=1 // pred_region
      %768 = dma.done [#allocation3], 1280
    $region29: #{lista_forward.1} parent=1 // pred_fallthru
      _
    %769 = vsyncpa [#allocation3], 1
    %770 = vsyncpa [#allocation4], 1

</llo_original>
